<compile_context>
chip_gen: v7x
topology: tpu7x:2x2x1
jax: 0.10.0
libtpu: 0.0.40
codegen_flags: <defaults>
</compile_context>

<pallas_src>
import numpy as np
import jax
import jax.numpy as jnp
from jax import lax
from jax.experimental import pallas as pl
from jax.experimental.pallas import tpu as pltpu

SPLIT_THRESHOLD = 0.0   # rtdetr_out_splitter score threshold (module spec)
SCORE_THRESHOLD = 0.5   # downstream NMS score threshold
IOU_THRESHOLD = 0.5     # NMS IoU threshold
SCALE = 640.0


def _splitter_nms_kernel(raw_ref, work_ref, split_ref, keep_ref):
    """raw_ref: [5, N] channel-major (cx, cy, w, h, score).

    work_ref : [8, N] = (x1, y1, x2, y2, area, score, 0, 0)
    split_ref: [5, N] = (cx*640, cy*640, w*640, h*640, score)  (module outputs)
    keep_ref : [1, N] int32 NMS keep mask
    """
    raw = raw_ref[...]
    n = raw.shape[1]

    cxcy = raw[0:2, :] * SCALE            # [2, N]
    wh = raw[2:4, :] * SCALE              # [2, N]
    score = raw[4:5, :]                   # [1, N]

    # --- splitter outputs (module spec): cxcywh * 640, unscaled score ---
    split_ref[...] = jnp.concatenate([cxcy, wh, score], axis=0)

    # --- cxcywh -> xyxy on [2, N] x/y-pair tiles ---
    half = 0.5 * wh
    xy1 = cxcy - half                     # [2, N]  (x1, y1)
    xy2 = cxcy + half                     # [2, N]  (x2, y2)
    diff = xy2 - xy1
    area = diff[0:1, :] * diff[1:2, :]    # [1, N]

    zeros2 = jnp.zeros((2, n), jnp.float32)
    work = jnp.concatenate([xy1, xy2, area, score, zeros2], axis=0)   # [8, N]
    work_ref[...] = work

    # splitter's score > 0 is implied by the NMS pre-filter score >= 0.5
    valid = score >= SCORE_THRESHOLD      # [1, N] bool
    idx = lax.broadcasted_iota(jnp.int32, (1, n), 1)
    neg1 = jnp.float32(-1.0)

    best0 = jnp.max(jnp.where(valid, score, neg1))

    def cond(carry):
        return carry[2] >= SCORE_THRESHOLD          # early exit: no alive box left

    def body(carry):
        keep_i, alive_i, best = carry
        alive = alive_i != 0
        # lowest-index alive lane attaining `best` (stable tie-break; matches
        # torchvision's stable-sort ordering for bit-identical scores)
        i = jnp.min(jnp.where((score == best) & alive, idx, n))
        sel = idx == i                                           # one-hot [1, N]
        sel_f = sel.astype(jnp.float32)

        # one fused cross-lane reduce extracts the selected box's values
        bvals = jnp.sum(work * sel_f, axis=1, keepdims=True)     # [8, 1]
        bxy1 = bvals[0:2, :]
        bxy2 = bvals[2:4, :]
        barea = bvals[4:5, :]

        ixy1 = jnp.maximum(xy1, bxy1)                            # [2, N]
        ixy2 = jnp.minimum(xy2, bxy2)
        iwh = jnp.maximum(ixy2 - ixy1, 0.0)
        inter = iwh[0:1, :] * iwh[1:2, :]                        # [1, N]

        # divide-free IoU test: inter / union > thr  <=>  inter > thr * union
        suppress = inter > IOU_THRESHOLD * (area + barea - inter)

        keep_i = keep_i | sel.astype(jnp.int32)
        alive_new = alive & jnp.logical_not(sel) & jnp.logical_not(suppress)
        new_best = jnp.max(jnp.where(alive_new, score, neg1))
        return keep_i, alive_new.astype(jnp.int32), new_best

    keep0 = jnp.zeros((1, n), jnp.int32)
    keep_i, _, _ = lax.while_loop(
        cond, body, (keep0, valid.astype(jnp.int32), best0))
    keep_ref[...] = keep_i


def rtdetr_postprocess(rtdetr_raw_out):
    """rtdetr_raw_out: [1, N, 5] (batch, queries, (cx, cy, w, h, score)).

    Returns:
      boxes_scores  [N, 5]  NMS-kept (x1, y1, x2, y2, score) rows first, in
                            descending-score order; remaining rows are padding.
      num_kept      []      number of NMS-kept boxes.
      cxcywh_scaled [N, 4]  splitter output (cxcywh * 640), padded.
      person_conf   [N]     splitter output (raw score), padded.
      split_valid   [N]     rows the splitter keeps (score > 0).
    """
    # TODO(synk): the PyTorch module returns dynamically-shaped tensors
    # (boolean-mask row filtering); TPU/Pallas has no dynamic output shapes, so
    # fixed-size padded tensors plus masks / a kept count are returned instead.
    x = rtdetr_raw_out[0].astype(jnp.float32)     # squeeze(0) -> [N, 5]
    n = x.shape[0]
    xt = x.T                                      # [5, N] channel-major

    work, split, keep_i32 = pl.pallas_call(
        _splitter_nms_kernel,
        out_shape=(jax.ShapeDtypeStruct((8, n), jnp.float32),
                   jax.ShapeDtypeStruct((5, n), jnp.float32),
                   jax.ShapeDtypeStruct((1, n), jnp.int32)),
        grid=(1,),
        in_specs=[pl.BlockSpec((5, n), lambda i: (0, 0))],
        out_specs=(pl.BlockSpec((8, n), lambda i: (0, 0)),
                   pl.BlockSpec((5, n), lambda i: (0, 0)),
                   pl.BlockSpec((1, n), lambda i: (0, 0))),
        compiler_params=pltpu.CompilerParams(
            dimension_semantics=("arbitrary",)),
    )(xt)

    keep = keep_i32[0].astype(bool)
    scores = work[5, :]
    boxes_scores = jnp.concatenate([work[0:4, :], work[5:6, :]], axis=0).T  # [N,5]
    order = jnp.argsort(jnp.where(keep, -scores, jnp.inf))   # kept first, desc score
    num_kept = jnp.sum(keep.astype(jnp.int32))

    cxcywh_scaled = split[0:4, :].T               # [N, 4]
    person_conf = split[4, :]                     # [N]
    split_valid = person_conf > SPLIT_THRESHOLD   # [N]

    return boxes_scores[order], num_kept, cxcywh_scaled, person_conf, split_valid


def _reference_postprocess(raw_np):
    """Pure-numpy reference mirroring the fused postprocess (f32 math)."""
    x = raw_np[0].astype(np.float32)
    x = x[x[:, 4] > SPLIT_THRESHOLD]
    cx = x[:, 0] * np.float32(SCALE)
    cy = x[:, 1] * np.float32(SCALE)
    w = x[:, 2] * np.float32(SCALE)
    h = x[:, 3] * np.float32(SCALE)
    x1 = cx - np.float32(0.5) * w
    y1 = cy - np.float32(0.5) * h
    x2 = cx + np.float32(0.5) * w
    y2 = cy + np.float32(0.5) * h
    bs = np.stack([x1, y1, x2, y2, x[:, 4]], axis=1)
    bs = bs[bs[:, 4] >= SCORE_THRESHOLD]

    bx1, by1, bx2, by2, sc = bs[:, 0], bs[:, 1], bs[:, 2], bs[:, 3], bs[:, 4]
    area = (bx2 - bx1) * (by2 - by1)
    order = np.argsort(-sc, kind="stable")
    suppressed = np.zeros(len(bs), dtype=bool)
    keep = []
    for i in order:
        if suppressed[i]:
            continue
        keep.append(i)
        ix1 = np.maximum(bx1, bx1[i])
        iy1 = np.maximum(by1, by1[i])
        ix2 = np.minimum(bx2, bx2[i])
        iy2 = np.minimum(by2, by2[i])
        iw = np.maximum(ix2 - ix1, np.float32(0.0))
        ih = np.maximum(iy2 - iy1, np.float32(0.0))
        inter = iw * ih
        iou = inter / (area + area[i] - inter)
        suppressed = suppressed | (iou > IOU_THRESHOLD)
        suppressed[i] = True
    if not keep:
        return bs[:0]
    return bs[np.array(keep, dtype=np.int64)]


if __name__ == "__main__":
    key = jax.random.PRNGKey(0)
    N = 128
    k1, k2, k3 = jax.random.split(key, 3)
    centers = jax.random.uniform(k1, (N, 2), jnp.float32, 0.2, 0.8)
    sizes = jax.random.uniform(k2, (N, 2), jnp.float32, 0.05, 0.3)
    scores = jax.random.uniform(k3, (N, 1), jnp.float32, 0.0, 1.0)
    raw = jnp.concatenate([centers, sizes, scores], axis=1)[None]   # [1, N, 5]

    outs = jax.jit(rtdetr_postprocess)(raw)
    outs = jax.block_until_ready(outs)
    boxes_scores, num_kept, cxcywh_scaled, person_conf, split_valid = outs
    raw_np = np.asarray(raw)

    # --- check the literal module outputs (splitter) ---
    rows = raw_np[0][raw_np[0][:, 4] > SPLIT_THRESHOLD]
    ref_cxcywh = rows[:, :4] * np.float32(SCALE)
    ref_conf = rows[:, 4]
    mask = np.asarray(split_valid)
    got_cxcywh = np.asarray(cxcywh_scaled)[mask]
    got_conf = np.asarray(person_conf)[mask]
    assert got_cxcywh.shape == ref_cxcywh.shape, (got_cxcywh.shape, ref_cxcywh.shape)
    assert np.allclose(got_cxcywh, ref_cxcywh, rtol=1e-5, atol=1e-4), "splitter boxes mismatch"
    assert np.allclose(got_conf, ref_conf, rtol=1e-6, atol=1e-6), "splitter conf mismatch"

    # --- check the fused NMS postprocess (baseline kernel semantics) ---
    k = int(num_kept)
    result = np.asarray(boxes_scores)[:k]                          # [K, 5]
    ref = _reference_postprocess(raw_np)
    assert result.shape == ref.shape, (result.shape, ref.shape)
    assert np.allclose(result, ref, rtol=1e-5, atol=1e-4), "mismatch vs reference"
    print("KERNEL_OK")
</pallas_src>

<mosaic_0001>
module attributes {stable_mosaic.version = 11 : i64} {
  func.func @_splitter_nms_kernel(%arg0: i32, %arg1: memref<5x128xf32, #tpu.memory_space<vmem>>, %arg2: memref<8x128xf32, #tpu.memory_space<vmem>>, %arg3: memref<5x128xf32, #tpu.memory_space<vmem>>, %arg4: memref<1x128xi32, #tpu.memory_space<vmem>>) attributes {dimension_semantics = [#tpu.dimension_semantics<arbitrary>], iteration_bounds = array<i64: 1>, scalar_prefetch = 0 : i64, scratch_operands = 0 : i64, tpu.core_type = #tpu.core_type<tc>, window_params = [{pipeline_mode = #tpu.pipeline_mode<synchronous>, transform_indices = @transform_0, window_bounds = array<i64: 5, 128>}, {pipeline_mode = #tpu.pipeline_mode<synchronous>, transform_indices = @transform_1, window_bounds = array<i64: 8, 128>}, {pipeline_mode = #tpu.pipeline_mode<synchronous>, transform_indices = @transform_2, window_bounds = array<i64: 5, 128>}, {pipeline_mode = #tpu.pipeline_mode<synchronous>, transform_indices = @transform_3, window_bounds = array<i64: 1, 128>}]} {
    %c0 = arith.constant 0 : index
    %c0_0 = arith.constant 0 : index
    %0 = vector.load %arg1[%c0, %c0_0] : memref<5x128xf32, #tpu.memory_space<vmem>>, vector<5x128xf32>
    %1 = vector.extract_strided_slice %0 {offsets = [0, 0], sizes = [2, 128], strides = [1, 1]} : vector<5x128xf32> to vector<2x128xf32>
    %cst = arith.constant 6.400000e+02 : f32
    %2 = vector.broadcast %cst : f32 to vector<2x128xf32>
    %3 = arith.mulf %1, %2 : vector<2x128xf32>
    %4 = vector.extract_strided_slice %0 {offsets = [2, 0], sizes = [2, 128], strides = [1, 1]} : vector<5x128xf32> to vector<2x128xf32>
    %cst_1 = arith.constant 6.400000e+02 : f32
    %5 = vector.broadcast %cst_1 : f32 to vector<2x128xf32>
    %6 = arith.mulf %4, %5 : vector<2x128xf32>
    %7 = vector.extract_strided_slice %0 {offsets = [4, 0], sizes = [1, 128], strides = [1, 1]} : vector<5x128xf32> to vector<1x128xf32>
    %8 = tpu.concatenate %3, %6, %7 in 0 : vector<2x128xf32>, vector<2x128xf32>, vector<1x128xf32> -> vector<5x128xf32>
    %c0_2 = arith.constant 0 : index
    %c0_3 = arith.constant 0 : index
    %9 = vector.load %arg3[%c0_2, %c0_3] : memref<5x128xf32, #tpu.memory_space<vmem>>, vector<5x128xf32>
    tpu.vector_store %arg3[%c0_2, %c0_3], %8 {strides = array<i32>} : memref<5x128xf32, #tpu.memory_space<vmem>>, vector<5x128xf32>,
    %cst_4 = arith.constant 5.000000e-01 : f32
    %10 = vector.broadcast %cst_4 : f32 to vector<2x128xf32>
    %11 = arith.mulf %10, %6 : vector<2x128xf32>
    %12 = arith.subf %3, %11 : vector<2x128xf32>
    %13 = arith.addf %3, %11 : vector<2x128xf32>
    %14 = arith.subf %13, %12 : vector<2x128xf32>
    %15 = vector.extract_strided_slice %14 {offsets = [0, 0], sizes = [1, 128], strides = [1, 1]} : vector<2x128xf32> to vector<1x128xf32>
    %16 = vector.extract_strided_slice %14 {offsets = [1, 0], sizes = [1, 128], strides = [1, 1]} : vector<2x128xf32> to vector<1x128xf32>
    %17 = arith.mulf %15, %16 : vector<1x128xf32>
    %cst_5 = arith.constant 0.000000e+00 : f32
    %18 = vector.broadcast %cst_5 : f32 to vector<2x128xf32>
    %19 = tpu.concatenate %12, %13, %17, %7, %18 in 0 : vector<2x128xf32>, vector<2x128xf32>, vector<1x128xf32>, vector<1x128xf32>, vector<2x128xf32> -> vector<8x128xf32>
    %c0_6 = arith.constant 0 : index
    %c0_7 = arith.constant 0 : index
    %20 = vector.load %arg2[%c0_6, %c0_7] : memref<8x128xf32, #tpu.memory_space<vmem>>, vector<8x128xf32>
    tpu.vector_store %arg2[%c0_6, %c0_7], %19 {strides = array<i32>} : memref<8x128xf32, #tpu.memory_space<vmem>>, vector<8x128xf32>,
    %cst_8 = arith.constant 5.000000e-01 : f32
    %21 = vector.broadcast %cst_8 : f32 to vector<1x128xf32>
    %22 = arith.cmpf oge, %7, %21 : vector<1x128xf32>
    %23 = tpu.iota {dimensions = array<i32: 1>} : vector<1x128xi32>
    %cst_9 = arith.constant -1.000000e+00 : f32
    %24 = vector.broadcast %cst_9 : f32 to vector<1x128xf32>
    %25 = arith.select %22, %7, %24 : vector<1x128xi1>, vector<1x128xf32>
    %26 = vector.shape_cast %25 : vector<1x128xf32> to vector<1x1x128xf32>
    %cst_10 = arith.constant dense<0xFF800000> : vector<1xf32>
    %27 = vector.multi_reduction <maximumf>, %26, %cst_10 [1, 2] : vector<1x1x128xf32> to vector<1xf32>
    %28 = vector.shape_cast %27 : vector<1xf32> to vector<1x1x1xf32>
    %29 = vector.extract %28[0, 0, 0] : f32 from vector<1x1x1xf32>
    %c0_i32 = arith.constant 0 : i32
    %30 = vector.broadcast %c0_i32 : i32 to vector<1x128xi32>
    %31 = arith.extui %22 : vector<1x128xi1> to vector<1x128xi32>
    %cst_11 = arith.constant -1.000000e+00 : f32
    %32:3 = scf.while (%arg5 = %30, %arg6 = %31, %arg7 = %29) : (vector<1x128xi32>, vector<1x128xi32>, f32) -> (vector<1x128xi32>, vector<1x128xi32>, f32) {
      %cst_14 = arith.constant 5.000000e-01 : f32
      %34 = arith.cmpf oge, %arg7, %cst_14 : f32
      scf.condition(%34) %arg5, %arg6, %arg7 : vector<1x128xi32>, vector<1x128xi32>, f32
    } do {
    ^bb0(%arg5: vector<1x128xi32>, %arg6: vector<1x128xi32>, %arg7: f32):
      %c0_i32_14 = arith.constant 0 : i32
      %34 = vector.broadcast %c0_i32_14 : i32 to vector<1x128xi32>
      %35 = arith.cmpi ne, %arg6, %34 : vector<1x128xi32>
      %36 = vector.broadcast %arg7 : f32 to vector<1x128xf32>
      %37 = arith.cmpf oeq, %7, %36 : vector<1x128xf32>
      %38 = arith.andi %37, %35 : vector<1x128xi1>
      %c128_i32 = arith.constant 128 : i32
      %39 = vector.broadcast %c128_i32 : i32 to vector<1x128xi32>
      %40 = arith.select %38, %23, %39 : vector<1x128xi1>, vector<1x128xi32>
      %41 = vector.shape_cast %40 : vector<1x128xi32> to vector<1x1x128xi32>
      %cst_15 = arith.constant dense<2147483647> : vector<1xi32>
      %42 = vector.multi_reduction <minsi>, %41, %cst_15 [1, 2] : vector<1x1x128xi32> to vector<1xi32>
      %43 = vector.shape_cast %42 : vector<1xi32> to vector<1x1x1xi32>
      %44 = vector.extract %43[0, 0, 0] : i32 from vector<1x1x1xi32>
      %45 = vector.broadcast %44 : i32 to vector<1x128xi32>
      %46 = arith.cmpi eq, %23, %45 : vector<1x128xi32>
      %47 = arith.extui %46 : vector<1x128xi1> to vector<1x128xi32>
      %48 = arith.sitofp %47 : vector<1x128xi32> to vector<1x128xf32>
      %49 = vector.broadcast %48 : vector<1x128xf32> to vector<8x128xf32>
      %50 = arith.mulf %19, %49 : vector<8x128xf32>
      %cst_16 = arith.constant dense<0.000000e+00> : vector<8xf32>
      %51 = vector.multi_reduction <add>, %50, %cst_16 [1] : vector<8x128xf32> to vector<8xf32>
      %52 = vector.shape_cast %51 : vector<8xf32> to vector<8x1xf32>
      %53 = vector.extract_strided_slice %52 {offsets = [0, 0], sizes = [2, 1], strides = [1, 1]} : vector<8x1xf32> to vector<2x1xf32>
      %54 = vector.extract_strided_slice %52 {offsets = [2, 0], sizes = [2, 1], strides = [1, 1]} : vector<8x1xf32> to vector<2x1xf32>
      %55 = vector.extract_strided_slice %52 {offsets = [4, 0], sizes = [1, 1], strides = [1, 1]} : vector<8x1xf32> to vector<1x1xf32>
      %56 = vector.broadcast %53 : vector<2x1xf32> to vector<2x128xf32>
      %57 = arith.maximumf %12, %56 : vector<2x128xf32>
      %58 = vector.broadcast %54 : vector<2x1xf32> to vector<2x128xf32>
      %59 = arith.minimumf %13, %58 : vector<2x128xf32>
      %60 = arith.subf %59, %57 : vector<2x128xf32>
      %cst_17 = arith.constant 0.000000e+00 : f32
      %61 = vector.broadcast %cst_17 : f32 to vector<2x128xf32>
      %62 = arith.maximumf %60, %61 : vector<2x128xf32>
      %63 = vector.extract_strided_slice %62 {offsets = [0, 0], sizes = [1, 128], strides = [1, 1]} : vector<2x128xf32> to vector<1x128xf32>
      %64 = vector.extract_strided_slice %62 {offsets = [1, 0], sizes = [1, 128], strides = [1, 1]} : vector<2x128xf32> to vector<1x128xf32>
      %65 = arith.mulf %63, %64 : vector<1x128xf32>
      %66 = vector.broadcast %55 : vector<1x1xf32> to vector<1x128xf32>
      %67 = arith.addf %17, %66 : vector<1x128xf32>
      %68 = arith.subf %67, %65 : vector<1x128xf32>
      %cst_18 = arith.constant 5.000000e-01 : f32
      %69 = vector.broadcast %cst_18 : f32 to vector<1x128xf32>
      %70 = arith.mulf %69, %68 : vector<1x128xf32>
      %71 = arith.cmpf ogt, %65, %70 : vector<1x128xf32>
      %72 = arith.extui %46 : vector<1x128xi1> to vector<1x128xi32>
      %73 = arith.ori %arg5, %72 : vector<1x128xi32>
      %cst_19 = arith.constant dense<true> : vector<1x128xi1>
      %74 = arith.xori %46, %cst_19 : vector<1x128xi1>
      %75 = arith.andi %35, %74 : vector<1x128xi1>
      %cst_20 = arith.constant dense<true> : vector<1x128xi1>
      %76 = arith.xori %71, %cst_20 : vector<1x128xi1>
      %77 = arith.andi %75, %76 : vector<1x128xi1>
      %78 = vector.broadcast %cst_11 : f32 to vector<1x128xf32>
      %79 = arith.select %77, %7, %78 : vector<1x128xi1>, vector<1x128xf32>
      %80 = vector.shape_cast %79 : vector<1x128xf32> to vector<1x1x128xf32>
      %cst_21 = arith.constant dense<0xFF800000> : vector<1xf32>
      %81 = vector.multi_reduction <maximumf>, %80, %cst_21 [1, 2] : vector<1x1x128xf32> to vector<1xf32>
      %82 = vector.shape_cast %81 : vector<1xf32> to vector<1x1x1xf32>
      %83 = vector.extract %82[0, 0, 0] : f32 from vector<1x1x1xf32>
      %84 = arith.extui %77 : vector<1x128xi1> to vector<1x128xi32>
      scf.yield %73, %84, %83 : vector<1x128xi32>, vector<1x128xi32>, f32
    }
    %c0_12 = arith.constant 0 : index
    %c0_13 = arith.constant 0 : index
    %33 = vector.load %arg4[%c0_12, %c0_13] : memref<1x128xi32, #tpu.memory_space<vmem>>, vector<1x128xi32>
    tpu.vector_store %arg4[%c0_12, %c0_13], %32#0 {strides = array<i32>} : memref<1x128xi32, #tpu.memory_space<vmem>>, vector<1x128xi32>,
    return
  }
  func.func @transform_0(%arg0: i32) -> (i32, i32) {
    %c0_i32 = arith.constant 0 : i32
    %c0_i32_0 = arith.constant 0 : i32
    %c0_i32_1 = arith.constant 0 : i32
    return %c0_i32, %c0_i32_0 : i32, i32
  }
  func.func @transform_1(%arg0: i32) -> (i32, i32) {
    %c0_i32 = arith.constant 0 : i32
    %c0_i32_0 = arith.constant 0 : i32
    %c0_i32_1 = arith.constant 0 : i32
    return %c0_i32, %c0_i32_0 : i32, i32
  }
  func.func @transform_2(%arg0: i32) -> (i32, i32) {
    %c0_i32 = arith.constant 0 : i32
    %c0_i32_0 = arith.constant 0 : i32
    %c0_i32_1 = arith.constant 0 : i32
    return %c0_i32, %c0_i32_0 : i32, i32
  }
  func.func @transform_3(%arg0: i32) -> (i32, i32) {
    %c0_i32 = arith.constant 0 : i32
    %c0_i32_0 = arith.constant 0 : i32
    %c0_i32_1 = arith.constant 0 : i32
    return %c0_i32, %c0_i32_0 : i32, i32
  }
}

</mosaic_0001>

<llo_original>
// kernel: rtdetr_postprocess.1
$region0: #{rtdetr_postprocess.1}
  #allocation0 [shape = 'u32[]', space=smem, size = 0x4, offset = 0x4, fixed_abs, tag = 'smem constant byte address 0x4 - core index']
  #allocation1 [shape = 'u32[144,128]{1,0:T(1,128)}', space=vmem, size = 0x12000, scoped, tag = 'internal scratch']
  %s0 = inlined_call_operand.vmem [shape: f32[5,128], index: 0, kind: input, shape index: {}]
  %s1 = inlined_call_operand.vmem [shape: f32[8,128], index: 1, kind: output, shape index: {0}]
  %s2 = inlined_call_operand.vmem [shape: f32[5,128], index: 2, kind: output, shape index: {1}]
  %s3 = inlined_call_operand.vmem [shape: s32[1,128], index: 3, kind: output, shape index: {2}]
  %4 = xla_tuple %s1, %s2, %s3
  %s5 = sld [smem:[#allocation0]]
  $region37: #{rtdetr_postprocess.1} parent=0
    _
  %s7 = ssub.s32 1, %s5
  %s8 = scalar_select 0, %s7, %s5
  // Predicated region
  $region2: #{rtdetr_postprocess.1} parent=0 // pred_check
    _
  $region3: #{rtdetr_postprocess.1} parent=0 // pred_check_branch
    %10 = sbr.rel (0) target = $region5
  $region4: #{rtdetr_postprocess.1} parent=0 // pred_region
    _
  $region5: #{rtdetr_postprocess.1} parent=0 // pred_fallthru
    _
  %v11 = vld [vmem:[%s0] sm:$0x1f]
  %v12 = vmul.f32 %v11, 640.0
  %vm13 = vcmask 1041408
  %vm14 = vcmask 1043456
  %v15 = vsel %vm14, %v12, %v11
  %16 = vst [vmem:[%s2] sm:$0x1f] %v15
  %v17 = vmul.f32 %v12, 0.5
  %v19 = vrot.slane %v17, 2
  %v21 = vsub.f32 %v12, %v19
  %v22 = vadd.f32 %v12, %v19
  %v23 = vsub.f32 %v22, %v21
  %v25 = vrot.slane %v23, 1
  %v27 = vmul.f32 %v23, %v25
  %v29 = vrot.slane %v22, 6
  %v32 = vrot.slane %v27, 4
  %v35 = vrot.slane %v11, 7
  %v37 = vsel %vm13, %v21, %v29
  %v38 = vsel %vm14, %v37, %v32
  %vm39 = vcmask 1044480
  %v40 = vsel %vm39, %v38, %v35
  %vm41 = vcmask 1045504
  %v42 = vsel %vm41, %v40, 0.0
  %43 = vst [vmem:[%s1] sm:$0xff] %v42
  %vm44 = vcmp.ge.f32.partialorder %v11, 0.5
  %v45 = vlaneseq
  %v46 = vand.u32 %v45, 127
  %v47 = vsel %vm44, %v11, -1.0
  %vm48 = vcmask 1044484
  %v49 = vsel %vm48, %v47, -inf
  %50 = vmax.xlane.f32.xlu0 %v49
  %v51 = vpop.xlane.xlu0 %50
  %v52 = vrot.slane %v51, 4
  %v53 = vmax.f32 %v51, %v52
  %v54 = vrot.slane %v53, 2
  %v55 = vmax.f32 %v53, %v54
  %v56 = vrot.slane %v55, 1
  %v57 = vmax.f32 %v55, %v56
  %s58 = vtos %v57
  %v59 = vsel %vm44, 1, 0
  // While loop
  $region6: #{rtdetr_postprocess.1} parent=0 // loop_pre_header
    _
  $region7: #{rtdetr_postprocess.1} parent=0 // loop_header
    %v61 = vphi 0, %v122
    %v62 = vphi %v59, %v141
    %s63 = sphi %s58, %s140
    %p64 = scmp.ge.f32.partialorder %s63, 0.5
    %p65 = pneg %p64
  $region8: #{rtdetr_postprocess.1} parent=0 // loop_header_branch
    %67 = sbr.rel (%p65) target = $region12
  $region9: #{rtdetr_postprocess.1} parent=0 // loop_body
    %vm68 = vcmp.ne.s32.totalorder %v62, 0
    %v69 = vstv %s63
    %vm70 = vcmp.eq.f32.partialorder %v11, %v69
    %vm71 = vmand %vm70, %vm68
    %v72 = vsel %vm71, %v46, 128
    %v73 = vsel %vm48, %v72, 2147483647
    %v74 = vand.u32 %v73, 65535
    %v75 = vshra.s32 %v73, 16
    %v76 = vcvt.s32.f32 %v74
    %v77 = vcvt.s32.f32 %v75
    %78 = vmin.xlane.f32.xlu0 %v77
    %v79 = vpop.xlane.xlu0 %78
    %vm80 = vcmp.eq.f32.partialorder %v77, %v79
    %v81 = vsel %vm80, %v76, inf
    %82 = vmin.xlane.f32.xlu0 %v81
    %v83 = vpop.xlane.xlu0 %82
    %v84 = vcvt.f32.s32 %v83
    %v85 = vcvt.f32.s32 %v79
    %v86 = vshll.u32 %v85, 16
    %v87 = vadd.s32 %v86, %v84
    %v88 = vrot.slane %v87, 4
    %vm89 = vcmp.lt.s32.totalorder %v87, %v88
    %v90 = vsel %vm89, %v87, %v88
    %v91 = vrot.slane %v90, 2
    %vm92 = vcmp.lt.s32.totalorder %v90, %v91
    %v93 = vsel %vm92, %v90, %v91
    %v94 = vrot.slane %v93, 1
    %vm95 = vcmp.lt.s32.totalorder %v93, %v94
    %v96 = vsel %vm95, %v93, %v94
    %s97 = vtos %v96
    %v98 = vstv %s97
    %vm99 = vcmp.eq.s32.totalorder %v46, %v98
    %v100 = vsel %vm99, 1, 0
    %v101 = vcvt.s32.f32 %v100
    %v102 = vmul.f32 %v42, %v101
    %103 = vadd.xlane.f32.xlu0 %v102
    %v104 = vpop.xlane.xlu0 %103
    %v105 = vmax.f32 %v21, %v104
    %v107 = vrot.slane %v104, 2
    %v109 = vmin.f32 %v22, %v107
    %v110 = vsub.f32 %v109, %v105
    %v111 = vmax.f32 %v110, 0.0
    %v113 = vrot.slane %v111, 1
    %v115 = vmul.f32 %v111, %v113
    %v116 = vrot.slane %v104, 4
    %v118 = vadd.f32 %v27, %v116
    %v119 = vsub.f32 %v118, %v115
    %v120 = vmul.f32 %v119, 0.5
    %vm121 = vcmp.gt.f32.partialorder %v115, %v120
    %v122 = vor.u32 %v61, %v100
    %vm123 = vmxor %vm99, 1
    %vm124 = vmand %vm68, %vm123
    %vm125 = vmxor %vm121, 1
    %v126 = vsel %vm125, 1, 0
    %v127 = vrot.slane %v126, 4
    %vm128 = vcmp.ne.s32.totalorder %v127, 0
    %vm129 = vmand %vm124, %vm128
    %v130 = vsel %vm129, %v11, -1.0
    %v131 = vsel %vm48, %v130, -inf
    %132 = vmax.xlane.f32.xlu0 %v131
    %v133 = vpop.xlane.xlu0 %132
    %v134 = vrot.slane %v133, 4
    %v135 = vmax.f32 %v133, %v134
    %v136 = vrot.slane %v135, 2
    %v137 = vmax.f32 %v135, %v136
    %v138 = vrot.slane %v137, 1
    %v139 = vmax.f32 %v137, %v138
    %s140 = vtos %v139
    %v141 = vsel %vm129, 1, 0
  $region10: #{rtdetr_postprocess.1} parent=0 // loop_footer
    _
  $region11: #{rtdetr_postprocess.1} parent=0 // loop_footer_branch
    %60 = sbr.rel target = $region7
  $region12: #{rtdetr_postprocess.1} parent=0 // loop_exit
    _
  %142 = vst [vmem:[%s3] sm:$0x1] %v61
  // Predicated region
  $region13: #{rtdetr_postprocess.1} parent=0 // pred_check
    _
  $region14: #{rtdetr_postprocess.1} parent=0 // pred_check_branch
    %144 = sbr.rel (0) target = $region16
  $region15: #{rtdetr_postprocess.1} parent=0 // pred_region
    _
  $region16: #{rtdetr_postprocess.1} parent=0 // pred_fallthru
    _
  // Predicated region
  $region17: #{rtdetr_postprocess.1} parent=0 // pred_check
    _
  $region18: #{rtdetr_postprocess.1} parent=0 // pred_check_branch
    %146 = sbr.rel (0) target = $region20
  $region19: #{rtdetr_postprocess.1} parent=0 // pred_region
    _
  $region20: #{rtdetr_postprocess.1} parent=0 // pred_fallthru
    _
  // Predicated region
  $region21: #{rtdetr_postprocess.1} parent=0 // pred_check
    _
  $region22: #{rtdetr_postprocess.1} parent=0 // pred_check_branch
    %148 = sbr.rel (0) target = $region24
  $region23: #{rtdetr_postprocess.1} parent=0 // pred_region
    _
  $region24: #{rtdetr_postprocess.1} parent=0 // pred_fallthru
    _
  // Predicated region
  $region25: #{rtdetr_postprocess.1} parent=0 // pred_check
    _
  $region26: #{rtdetr_postprocess.1} parent=0 // pred_check_branch
    %150 = sbr.rel (0) target = $region28
  $region27: #{rtdetr_postprocess.1} parent=0 // pred_region
    _
  $region28: #{rtdetr_postprocess.1} parent=0 // pred_fallthru
    _
  // Predicated region
  $region29: #{rtdetr_postprocess.1} parent=0 // pred_check
    _
  $region30: #{rtdetr_postprocess.1} parent=0 // pred_check_branch
    %152 = sbr.rel (0) target = $region32
  $region31: #{rtdetr_postprocess.1} parent=0 // pred_region
    _
  $region32: #{rtdetr_postprocess.1} parent=0 // pred_fallthru
    _
  // Predicated region
  $region33: #{rtdetr_postprocess.1} parent=0 // pred_check
    _
  $region34: #{rtdetr_postprocess.1} parent=0 // pred_check_branch
    %154 = sbr.rel (0) target = $region36
  $region35: #{rtdetr_postprocess.1} parent=0 // pred_region
    _
  $region36: #{rtdetr_postprocess.1} parent=0 // pred_fallthru
    _

</llo_original>
